<compile_context>
chip_gen: v7x
topology: tpu7x:2x2x1
jax: 0.10.0
libtpu: 0.0.40
codegen_flags: <defaults>
</compile_context>

<pallas_src>
import functools

import jax
import jax.numpy as jnp
from jax import lax
from jax.experimental import pallas as pl
from jax.experimental.pallas import tpu as pltpu  # noqa: F401  (TPU backend)

BN_EPS = 1e-5


# ----------------------------------------------------------------------------
# Fused Conv(as matmul on im2col patches) + BatchNorm(batch stats) + ReLU.
# Single program; every operand is a full-array VMEM block.
#   w_ref : (COUT, KC)   folded conv weight, KC = KD*KH*KW*CIN
#   p_ref : (KC, M)      im2col patches, M = N*DO*HO*WO  (lane axis = M)
#   g_ref : (COUT, 1)    BatchNorm gamma
#   b_ref : (COUT, 1)    BatchNorm beta
#   o_ref : (COUT, M)    output, lane-dense
# ----------------------------------------------------------------------------
def _fused_conv_bn_relu_kernel(w_ref, p_ref, g_ref, b_ref, o_ref):
    # Conv as one MXU matmul, f32 accumulation.
    conv = jnp.dot(w_ref[...], p_ref[...],
                   preferred_element_type=jnp.float32)        # (COUT, M)

    m = conv.shape[1]
    inv_m = 1.0 / float(m)

    # Single-pass batch statistics per channel (reduce over the lane axis).
    s1 = jnp.sum(conv, axis=1, keepdims=True)                 # (COUT, 1)
    s2 = jnp.sum(conv * conv, axis=1, keepdims=True)          # (COUT, 1)
    mean = s1 * inv_m
    var = s2 * inv_m - mean * mean                            # biased variance

    # Fold gamma/beta into a single FMA per element, then ReLU.
    scale = g_ref[...] * lax.rsqrt(var + BN_EPS)               # (COUT, 1)
    shift = b_ref[...] - mean * scale                          # (COUT, 1)
    o_ref[...] = jnp.maximum(conv * scale + shift, 0.0)


# ----------------------------------------------------------------------------
# Wrapper: PyTorch-compatible interface (NCDHW activations, OIDHW weights).
# All wrapper-side ops are pure layout plumbing (transpose / pad / gather /
# reshape) — zero arithmetic.
# ----------------------------------------------------------------------------
@functools.partial(jax.jit, static_argnames=("stride", "padding", "dilation"))
def batchnorm_relu_3d(x_ncdhw, weight_oidhw, gamma, beta,
                      *, stride=1, padding=0, dilation=1):
    N, CIN, D, H, W = x_ncdhw.shape
    COUT, _, KD, KH, KW = weight_oidhw.shape

    DO = (D + 2 * padding - dilation * (KD - 1) - 1) // stride + 1
    HO = (H + 2 * padding - dilation * (KH - 1) - 1) // stride + 1
    WO = (W + 2 * padding - dilation * (KW - 1) - 1) // stride + 1
    M = N * DO * HO * WO
    KC = KD * KH * KW * CIN

    # NCDHW -> NDHWC (channels last), pad spatially.
    x = jnp.transpose(x_ncdhw, (0, 2, 3, 4, 1)).astype(jnp.float32)
    xp = jnp.pad(x, ((0, 0), (padding, padding), (padding, padding),
                     (padding, padding), (0, 0)))

    # im2col gather (data movement only): patches laid out as (KC, M) so that
    # the flattened (n, do, ho, wo) index lands in the TPU lane axis.
    slabs = []
    for kd in range(KD):
        for kh in range(KH):
            for kw in range(KW):
                sl = lax.slice(
                    xp,
                    (0, kd * dilation, kh * dilation, kw * dilation, 0),
                    (N,
                     kd * dilation + (DO - 1) * stride + 1,
                     kh * dilation + (HO - 1) * stride + 1,
                     kw * dilation + (WO - 1) * stride + 1,
                     CIN),
                    (1, stride, stride, stride, 1))
                slabs.append(sl)                       # (N, DO, HO, WO, CIN)
    pt = jnp.stack(slabs, axis=0)                      # (KD*KH*KW, N, DO, HO, WO, CIN)
    pt = jnp.moveaxis(pt, -1, 1)                       # (taps, CIN, N, DO, HO, WO)
    pt = pt.reshape(KC, M)                             # (KC, M)

    # Fold conv weight to (COUT, KC) with the matching (kd, kh, kw, cin) order.
    w2t = jnp.transpose(weight_oidhw, (0, 2, 3, 4, 1)) \
             .reshape(COUT, KC).astype(jnp.float32)

    g = gamma.reshape(COUT, 1).astype(jnp.float32)
    b = beta.reshape(COUT, 1).astype(jnp.float32)

    out_t = pl.pallas_call(
        _fused_conv_bn_relu_kernel,
        out_shape=jax.ShapeDtypeStruct((COUT, M), jnp.float32),
    )(w2t, pt, g, b)                                   # (COUT, M), lane-dense

    # (COUT, N, DO, HO, WO) -> NCDHW
    y = out_t.reshape(COUT, N, DO, HO, WO)
    return jnp.transpose(y, (1, 0, 2, 3, 4))

# TODO(synk): PyTorch BatchNorm3d also updates running_mean/running_var buffers
# (momentum=0.1) as a training-time side effect; that stateful update does not
# affect the forward output and is not modeled here.


# ----------------------------------------------------------------------------
# Pure-JAX reference (for correctness check only).
# ----------------------------------------------------------------------------
def _reference(x, w, gamma, beta, stride, padding, dilation):
    conv = lax.conv_general_dilated(
        x, w,
        window_strides=(stride,) * 3,
        padding=[(padding, padding)] * 3,
        rhs_dilation=(dilation,) * 3,
        dimension_numbers=("NCDHW", "OIDHW", "NCDHW"))
    mean = jnp.mean(conv, axis=(0, 2, 3, 4), keepdims=True)
    var = jnp.mean(jnp.square(conv - mean), axis=(0, 2, 3, 4), keepdims=True)
    g = gamma.reshape(1, -1, 1, 1, 1)
    b = beta.reshape(1, -1, 1, 1, 1)
    y = (conv - mean) * lax.rsqrt(var + BN_EPS) * g + b
    return jnp.maximum(y, 0.0)


if __name__ == "__main__":
    # Module config: BatchNormRelu3D(in_channels=4, out_channels=8, kernel_size=3,
    #                                stride=1, padding=1, dilation=1, bias=False)
    N, CIN, COUT, K = 2, 4, 8, 3
    D = H = W = 8
    stride, padding, dilation = 1, 1, 1

    key = jax.random.PRNGKey(0)
    kx, kw = jax.random.split(key)
    x = jax.random.normal(kx, (N, CIN, D, H, W), jnp.float32)

    # Conv3d weight init at PyTorch's default scale (uniform +-1/sqrt(fan_in));
    # bias=False -> no bias tensor.
    fan_in = CIN * K * K * K
    bound = 1.0 / (fan_in ** 0.5)
    weight = jax.random.uniform(kw, (COUT, CIN, K, K, K), jnp.float32,
                                minval=-bound, maxval=bound)
    # BatchNorm3d affine params at PyTorch init values.
    gamma = jnp.ones((COUT,), jnp.float32)
    beta = jnp.zeros((COUT,), jnp.float32)

    out = batchnorm_relu_3d(x, weight, gamma, beta,
                            stride=stride, padding=padding, dilation=dilation)
    out = jax.block_until_ready(out)

    ref = _reference(x, weight, gamma, beta, stride, padding, dilation)
    assert out.shape == ref.shape, (out.shape, ref.shape)
    assert jnp.allclose(out, ref, atol=1e-4, rtol=1e-4), \
        float(jnp.max(jnp.abs(out - ref)))

    print("KERNEL_OK")
</pallas_src>

<mosaic_0001>
module attributes {stable_mosaic.version = 11 : i64} {
  func.func @_fused_conv_bn_relu_kernel(%arg0: memref<8x108xf32, #tpu.memory_space<vmem>>, %arg1: memref<108x1024xf32, #tpu.memory_space<vmem>>, %arg2: memref<8x1xf32, #tpu.memory_space<vmem>>, %arg3: memref<8x1xf32, #tpu.memory_space<vmem>>, %arg4: memref<8x1024xf32, #tpu.memory_space<vmem>>) attributes {dimension_semantics = [], scalar_prefetch = 0 : i64, scratch_operands = 0 : i64, tpu.core_type = #tpu.core_type<tc>} {
    %c0 = arith.constant 0 : index
    %c0_0 = arith.constant 0 : index
    %0 = vector.load %arg0[%c0, %c0_0] : memref<8x108xf32, #tpu.memory_space<vmem>>, vector<8x108xf32>
    %c0_1 = arith.constant 0 : index
    %c0_2 = arith.constant 0 : index
    %1 = vector.load %arg1[%c0_1, %c0_2] : memref<108x1024xf32, #tpu.memory_space<vmem>>, vector<108x1024xf32>
    %cst = arith.constant dense<0.000000e+00> : vector<8x1024xf32>
    %2 = tpu.matmul %0, %1, %cst {dimension_numbers = #tpu.dot_dimension_numbers<[1], [0], [0], [1], [0, 0, 1, 1], [], []>} : vector<8x108xf32>, vector<108x1024xf32>, vector<8x1024xf32> -> vector<8x1024xf32>
    %cst_3 = arith.constant dense<0.000000e+00> : vector<8xf32>
    %3 = vector.multi_reduction <add>, %2, %cst_3 [1] : vector<8x1024xf32> to vector<8xf32>
    %4 = vector.shape_cast %3 : vector<8xf32> to vector<8x1xf32>
    %5 = arith.mulf %2, %2 : vector<8x1024xf32>
    %cst_4 = arith.constant dense<0.000000e+00> : vector<8xf32>
    %6 = vector.multi_reduction <add>, %5, %cst_4 [1] : vector<8x1024xf32> to vector<8xf32>
    %7 = vector.shape_cast %6 : vector<8xf32> to vector<8x1xf32>
    %cst_5 = arith.constant 9.765625E-4 : f32
    %8 = vector.broadcast %cst_5 : f32 to vector<8x1xf32>
    %9 = arith.mulf %4, %8 : vector<8x1xf32>
    %cst_6 = arith.constant 9.765625E-4 : f32
    %10 = vector.broadcast %cst_6 : f32 to vector<8x1xf32>
    %11 = arith.mulf %7, %10 : vector<8x1xf32>
    %12 = arith.mulf %9, %9 : vector<8x1xf32>
    %13 = arith.subf %11, %12 : vector<8x1xf32>
    %c0_7 = arith.constant 0 : index
    %c0_8 = arith.constant 0 : index
    %14 = vector.load %arg2[%c0_7, %c0_8] : memref<8x1xf32, #tpu.memory_space<vmem>>, vector<8x1xf32>
    %cst_9 = arith.constant 9.99999974E-6 : f32
    %15 = vector.broadcast %cst_9 : f32 to vector<8x1xf32>
    %16 = arith.addf %13, %15 : vector<8x1xf32>
    %17 = math.rsqrt %16 : vector<8x1xf32>
    %18 = arith.mulf %14, %17 : vector<8x1xf32>
    %c0_10 = arith.constant 0 : index
    %c0_11 = arith.constant 0 : index
    %19 = vector.load %arg3[%c0_10, %c0_11] : memref<8x1xf32, #tpu.memory_space<vmem>>, vector<8x1xf32>
    %20 = arith.mulf %9, %18 : vector<8x1xf32>
    %21 = arith.subf %19, %20 : vector<8x1xf32>
    %22 = vector.broadcast %18 : vector<8x1xf32> to vector<8x1024xf32>
    %23 = arith.mulf %2, %22 : vector<8x1024xf32>
    %24 = vector.broadcast %21 : vector<8x1xf32> to vector<8x1024xf32>
    %25 = arith.addf %23, %24 : vector<8x1024xf32>
    %cst_12 = arith.constant 0.000000e+00 : f32
    %26 = vector.broadcast %cst_12 : f32 to vector<8x1024xf32>
    %27 = arith.maximumf %25, %26 : vector<8x1024xf32>
    %c0_13 = arith.constant 0 : index
    %c0_14 = arith.constant 0 : index
    %28 = vector.load %arg4[%c0_13, %c0_14] : memref<8x1024xf32, #tpu.memory_space<vmem>>, vector<8x1024xf32>
    tpu.vector_store %arg4[%c0_13, %c0_14], %27 {strides = array<i32>} : memref<8x1024xf32, #tpu.memory_space<vmem>>, vector<8x1024xf32>,
    return
  }
}

</mosaic_0001>

<llo_original>
// kernel: batchnorm_relu_3d.1
$region0: #{batchnorm_relu_3d.1}
  #allocation0 [shape = 'u32[]', space=smem, size = 0x4, offset = 0x4, fixed_abs, tag = 'smem constant byte address 0x4 - core index']
  #allocation1 [shape = 'u32[144,128]{1,0:T(1,128)}', space=vmem, size = 0x12000, scoped, tag = 'internal scratch']
  %s0 = inlined_call_operand.vmem [shape: f32[8,108], index: 0, kind: input, shape index: {}]
  %s1 = inlined_call_operand.vmem [shape: f32[108,1024], index: 1, kind: input, shape index: {}]
  %s2 = inlined_call_operand.vmem [shape: f32[8,1], index: 2, kind: input, shape index: {}]
  %s3 = inlined_call_operand.vmem [shape: f32[8,1], index: 3, kind: input, shape index: {}]
  %s4 = inlined_call_operand.vmem [shape: f32[8,1024], index: 4, kind: output, shape index: {}]
  %s5 = sld [smem:[#allocation0]]
  $region26: #{batchnorm_relu_3d.1} parent=0
    _
  %s7 = ssub.s32 1, %s5
  %s8 = scalar_select 0, %s7, %s5
  // Predicated region
  $region2: #{batchnorm_relu_3d.1} parent=0 // pred_check
    _
  $region3: #{batchnorm_relu_3d.1} parent=0 // pred_check_branch
    %10 = sbr.rel (0) target = $region5
  $region4: #{batchnorm_relu_3d.1} parent=0 // pred_region
    _
  $region5: #{batchnorm_relu_3d.1} parent=0 // pred_fallthru
    _
  // Predicated region
  $region6: #{batchnorm_relu_3d.1} parent=0 // pred_check
    _
  $region7: #{batchnorm_relu_3d.1} parent=0 // pred_check_branch
    %12 = sbr.rel (0) target = $region9
  $region8: #{batchnorm_relu_3d.1} parent=0 // pred_region
    _
  $region9: #{batchnorm_relu_3d.1} parent=0 // pred_fallthru
    _
  // Predicated region
  $region10: #{batchnorm_relu_3d.1} parent=0 // pred_check
    _
  $region11: #{batchnorm_relu_3d.1} parent=0 // pred_check_branch
    %14 = sbr.rel (0) target = $region13
  $region12: #{batchnorm_relu_3d.1} parent=0 // pred_region
    _
  $region13: #{batchnorm_relu_3d.1} parent=0 // pred_fallthru
    _
  // Predicated region
  $region14: #{batchnorm_relu_3d.1} parent=0 // pred_check
    _
  $region15: #{batchnorm_relu_3d.1} parent=0 // pred_check_branch
    %16 = sbr.rel (0) target = $region17
  $region16: #{batchnorm_relu_3d.1} parent=0 // pred_region
    _
  $region17: #{batchnorm_relu_3d.1} parent=0 // pred_fallthru
    _
  %v17 = vld [vmem:[%s0] sm:$0xff]
  %v18 = vld [vmem:[%s1] sm:$0xff]
  %v19 = vld [vmem:[%s1 + $0x8] sm:$0xff]
  %v20 = vld [vmem:[%s1 + $0x10] sm:$0xff]
  %v21 = vld [vmem:[%s1 + $0x18] sm:$0xff]
  %v22 = vld [vmem:[%s1 + $0x20] sm:$0xff]
  %v23 = vld [vmem:[%s1 + $0x28] sm:$0xff]
  %v24 = vld [vmem:[%s1 + $0x30] sm:$0xff]
  %v25 = vld [vmem:[%s1 + $0x38] sm:$0xff]
  %v26 = vld [vmem:[%s1 + $0x40] sm:$0xff]
  %v27 = vld [vmem:[%s1 + $0x48] sm:$0xff]
  %v28 = vld [vmem:[%s1 + $0x50] sm:$0xff]
  %v29 = vld [vmem:[%s1 + $0x58] sm:$0xff]
  %v30 = vld [vmem:[%s1 + $0x60] sm:$0xff]
  %v31 = vld [vmem:[%s1 + $0x68] sm:$0xff]
  %v32 = vld [vmem:[%s1 + $0x70] sm:$0xff]
  %v33 = vld [vmem:[%s1 + $0x78] sm:$0xff]
  %v34 = vld [vmem:[%s1 + $0x80] sm:$0xff]
  %v35 = vld [vmem:[%s1 + $0x88] sm:$0xff]
  %v36 = vld [vmem:[%s1 + $0x90] sm:$0xff]
  %v37 = vld [vmem:[%s1 + $0x98] sm:$0xff]
  %v38 = vld [vmem:[%s1 + $0xa0] sm:$0xff]
  %v39 = vld [vmem:[%s1 + $0xa8] sm:$0xff]
  %v40 = vld [vmem:[%s1 + $0xb0] sm:$0xff]
  %v41 = vld [vmem:[%s1 + $0xb8] sm:$0xff]
  %v42 = vld [vmem:[%s1 + $0xc0] sm:$0xff]
  %v43 = vld [vmem:[%s1 + $0xc8] sm:$0xff]
  %v44 = vld [vmem:[%s1 + $0xd0] sm:$0xff]
  %v45 = vld [vmem:[%s1 + $0xd8] sm:$0xff]
  %v46 = vld [vmem:[%s1 + $0xe0] sm:$0xff]
  %v47 = vld [vmem:[%s1 + $0xe8] sm:$0xff]
  %v48 = vld [vmem:[%s1 + $0xf0] sm:$0xff]
  %v49 = vld [vmem:[%s1 + $0xf8] sm:$0xff]
  %v50 = vld [vmem:[%s1 + $0x100] sm:$0xff]
  %v51 = vld [vmem:[%s1 + $0x108] sm:$0xff]
  %v52 = vld [vmem:[%s1 + $0x110] sm:$0xff]
  %v53 = vld [vmem:[%s1 + $0x118] sm:$0xff]
  %v54 = vld [vmem:[%s1 + $0x120] sm:$0xff]
  %v55 = vld [vmem:[%s1 + $0x128] sm:$0xff]
  %v56 = vld [vmem:[%s1 + $0x130] sm:$0xff]
  %v57 = vld [vmem:[%s1 + $0x138] sm:$0xff]
  %v58 = vld [vmem:[%s1 + $0x140] sm:$0xff]
  %v59 = vld [vmem:[%s1 + $0x148] sm:$0xff]
  %v60 = vld [vmem:[%s1 + $0x150] sm:$0xff]
  %v61 = vld [vmem:[%s1 + $0x158] sm:$0xff]
  %v62 = vld [vmem:[%s1 + $0x160] sm:$0xff]
  %v63 = vld [vmem:[%s1 + $0x168] sm:$0xff]
  %v64 = vld [vmem:[%s1 + $0x170] sm:$0xff]
  %v65 = vld [vmem:[%s1 + $0x178] sm:$0xff]
  %v66 = vld [vmem:[%s1 + $0x180] sm:$0xff]
  %v67 = vld [vmem:[%s1 + $0x188] sm:$0xff]
  %v68 = vld [vmem:[%s1 + $0x190] sm:$0xff]
  %v69 = vld [vmem:[%s1 + $0x198] sm:$0xff]
  %v70 = vld [vmem:[%s1 + $0x1a0] sm:$0xff]
  %v71 = vld [vmem:[%s1 + $0x1a8] sm:$0xff]
  %v72 = vld [vmem:[%s1 + $0x1b0] sm:$0xff]
  %v73 = vld [vmem:[%s1 + $0x1b8] sm:$0xff]
  %v74 = vld [vmem:[%s1 + $0x1c0] sm:$0xff]
  %v75 = vld [vmem:[%s1 + $0x1c8] sm:$0xff]
  %v76 = vld [vmem:[%s1 + $0x1d0] sm:$0xff]
  %v77 = vld [vmem:[%s1 + $0x1d8] sm:$0xff]
  %v78 = vld [vmem:[%s1 + $0x1e0] sm:$0xff]
  %v79 = vld [vmem:[%s1 + $0x1e8] sm:$0xff]
  %v80 = vld [vmem:[%s1 + $0x1f0] sm:$0xff]
  %v81 = vld [vmem:[%s1 + $0x1f8] sm:$0xff]
  %v82 = vld [vmem:[%s1 + $0x200] sm:$0xff]
  %v83 = vld [vmem:[%s1 + $0x208] sm:$0xff]
  %v84 = vld [vmem:[%s1 + $0x210] sm:$0xff]
  %v85 = vld [vmem:[%s1 + $0x218] sm:$0xff]
  %v86 = vld [vmem:[%s1 + $0x220] sm:$0xff]
  %v87 = vld [vmem:[%s1 + $0x228] sm:$0xff]
  %v88 = vld [vmem:[%s1 + $0x230] sm:$0xff]
  %v89 = vld [vmem:[%s1 + $0x238] sm:$0xff]
  %v90 = vld [vmem:[%s1 + $0x240] sm:$0xff]
  %v91 = vld [vmem:[%s1 + $0x248] sm:$0xff]
  %v92 = vld [vmem:[%s1 + $0x250] sm:$0xff]
  %v93 = vld [vmem:[%s1 + $0x258] sm:$0xff]
  %v94 = vld [vmem:[%s1 + $0x260] sm:$0xff]
  %v95 = vld [vmem:[%s1 + $0x268] sm:$0xff]
  %v96 = vld [vmem:[%s1 + $0x270] sm:$0xff]
  %v97 = vld [vmem:[%s1 + $0x278] sm:$0xff]
  %v98 = vld [vmem:[%s1 + $0x280] sm:$0xff]
  %v99 = vld [vmem:[%s1 + $0x288] sm:$0xff]
  %v100 = vld [vmem:[%s1 + $0x290] sm:$0xff]
  %v101 = vld [vmem:[%s1 + $0x298] sm:$0xff]
  %v102 = vld [vmem:[%s1 + $0x2a0] sm:$0xff]
  %v103 = vld [vmem:[%s1 + $0x2a8] sm:$0xff]
  %v104 = vld [vmem:[%s1 + $0x2b0] sm:$0xff]
  %v105 = vld [vmem:[%s1 + $0x2b8] sm:$0xff]
  %v106 = vld [vmem:[%s1 + $0x2c0] sm:$0xff]
  %v107 = vld [vmem:[%s1 + $0x2c8] sm:$0xff]
  %v108 = vld [vmem:[%s1 + $0x2d0] sm:$0xff]
  %v109 = vld [vmem:[%s1 + $0x2d8] sm:$0xff]
  %v110 = vld [vmem:[%s1 + $0x2e0] sm:$0xff]
  %v111 = vld [vmem:[%s1 + $0x2e8] sm:$0xff]
  %v112 = vld [vmem:[%s1 + $0x2f0] sm:$0xff]
  %v113 = vld [vmem:[%s1 + $0x2f8] sm:$0xff]
  %v114 = vld [vmem:[%s1 + $0x300] sm:$0xff]
  %v115 = vld [vmem:[%s1 + $0x308] sm:$0xff]
  %v116 = vld [vmem:[%s1 + $0x310] sm:$0xff]
  %v117 = vld [vmem:[%s1 + $0x318] sm:$0xff]
  %v118 = vld [vmem:[%s1 + $0x320] sm:$0xff]
  %v119 = vld [vmem:[%s1 + $0x328] sm:$0xff]
  %v120 = vld [vmem:[%s1 + $0x330] sm:$0xff]
  %v121 = vld [vmem:[%s1 + $0x338] sm:$0xff]
  %v122 = vld [vmem:[%s1 + $0x340] sm:$0xf]
  %v123 = vld [vmem:[%s1 + $0x348] sm:$0xf]
  %v124 = vld [vmem:[%s1 + $0x350] sm:$0xf]
  %v125 = vld [vmem:[%s1 + $0x358] sm:$0xf]
  %v126 = vld [vmem:[%s1 + $0x360] sm:$0xf]
  %v127 = vld [vmem:[%s1 + $0x368] sm:$0xf]
  %v128 = vld [vmem:[%s1 + $0x370] sm:$0xf]
  %v129 = vld [vmem:[%s1 + $0x378] sm:$0xf]
  %vm130 = vcmask 883712
  %v132 = vsel %vm130, %v17, 0
  %vm134 = vcmask 1043456
  %v136 = vsel %vm134, %v122, 0
  %v139 = vsel %vm134, %v123, 0
  %v142 = vsel %vm134, %v124, 0
  %v145 = vsel %vm134, %v125, 0
  %v148 = vsel %vm134, %v126, 0
  %v151 = vsel %vm134, %v127, 0
  %v154 = vsel %vm134, %v128, 0
  %v157 = vsel %vm134, %v129, 0
  %159 = vmatprep.subr.mxu0 %v19
  %160 = vmatpush1.msra.mxu0 %v18
  %161 = vmatprep.subr.mxu0 %v27
  %162 = vmatpush1.msra.mxu0 %v26
  %163 = vmatprep.subr.mxu0 %v35
  %164 = vmatpush1.msra.mxu0 %v34
  %165 = vmatprep.subr.mxu0 %v43
  %166 = vmatpush1.msra.mxu0 %v42
  %167 = vmatprep.subr.mxu0 %v51
  %168 = vmatpush1.msra.mxu0 %v50
  %169 = vmatprep.subr.mxu0 %v59
  %170 = vmatpush1.msra.mxu0 %v58
  %171 = vmatprep.subr.mxu0 %v67
  %172 = vmatpush1.msra.mxu0 %v66
  %173 = vmatprep.subr.mxu0 %v75
  %174 = vmatpush1.msra.mxu0 %v74
  %175 = vmatprep.subr.mxu0 %v83
  %176 = vmatpush1.msra.mxu0 %v82
  %177 = vmatprep.subr.mxu0 %v91
  %178 = vmatpush1.msra.mxu0 %v90
  %179 = vmatprep.subr.mxu0 %v99
  %180 = vmatpush1.msra.mxu0 %v98
  %181 = vmatprep.subr.mxu0 %v107
  %182 = vmatpush1.msra.mxu0 %v106
  %183 = vmatprep.subr.mxu0 %v115
  %184 = vmatpush1.msra.mxu0 %v114
  %185 = vmatprep.subr.mxu0 %v139
  %186 = vmatpush1.msra.mxu0 %v136
  %187 = vmatprep.subr.mxu0 0.0
  %188 = vmatpush1.msra.mxu0 0.0
  %189 = vmatprep.subr.mxu0 0.0
  %190 = vmatpush1.msra.mxu0 0.0
  %191 = vmatprep.subr.mxu0 0.0
  %192 = vmatpush1.msra.mxu0 0.0
  %193 = vmatprep.subr.mxu0 0.0
  %194 = vmatpush1.msra.mxu0 0.0
  %195 = vmatprep.subr.mxu0 0.0
  %196 = vmatpush1.msra.mxu0 0.0
  %197 = vmatprep.subr.mxu0 0.0
  %198 = vmatpush1.msra.mxu0 0.0
  %199 = vmatprep.subr.mxu0 0.0
  %200 = vmatpush1.msra.mxu0 0.0
  %201 = vmatprep.subr.mxu0 0.0
  %202 = vmatpush1.msra.mxu0 0.0
  %203 = vmatprep.subr.mxu0 0.0
  %204 = vmatpush1.msra.mxu0 0.0
  %205 = vmatprep.subr.mxu0 0.0
  %206 = vmatpush1.msra.mxu0 0.0
  %207 = vmatprep.subr.mxu0 0.0
  %208 = vmatpush1.msra.mxu0 0.0
  %209 = vmatprep.subr.mxu0 0.0
  %210 = vmatpush1.msra.mxu0 0.0
  %211 = vmatprep.subr.mxu0 0.0
  %212 = vmatpush1.msra.mxu0 0.0
  %213 = vmatprep.subr.mxu0 0.0
  %214 = vmatpush1.msra.mxu0 0.0
  %215 = vmatprep.subr.mxu0 0.0
  %216 = vmatpush1.msra.mxu0 0.0
  %217 = vmatprep.subr.mxu0 0.0
  %218 = vmatpush1.msra.mxu0 0.0
  %219 = vmatprep.subr.mxu0 0.0
  %220 = vmatpush1.msra.mxu0 0.0
  %221 = vmatprep.subr.mxu0 0.0
  %222 = vmatpush1.msra.mxu0 0.0
  %223 = vmatprep.mubr.f32.mxu0 0.0
  %224 = vmatmul.mubr.f32.gmra.mrb[0].mxu0 %v132
  %v225 = vpop.f32.mrb[0].mxu0
  %v226 = vadd.f32 0.0, %v225
  %v227 = vpop.f32.mrb[0].mxu0
  %v228 = vadd.f32 0.0, %v227
  %229 = vdwg.mxu0
  %230 = vmatprep.subr.mxu0 %v21
  %231 = vmatpush1.msra.mxu0 %v20
  %232 = vmatprep.subr.mxu0 %v29
  %233 = vmatpush1.msra.mxu0 %v28
  %234 = vmatprep.subr.mxu0 %v37
  %235 = vmatpush1.msra.mxu0 %v36
  %236 = vmatprep.subr.mxu0 %v45
  %237 = vmatpush1.msra.mxu0 %v44
  %238 = vmatprep.subr.mxu0 %v53
  %239 = vmatpush1.msra.mxu0 %v52
  %240 = vmatprep.subr.mxu0 %v61
  %241 = vmatpush1.msra.mxu0 %v60
  %242 = vmatprep.subr.mxu0 %v69
  %243 = vmatpush1.msra.mxu0 %v68
  %244 = vmatprep.subr.mxu0 %v77
  %245 = vmatpush1.msra.mxu0 %v76
  %246 = vmatprep.subr.mxu0 %v85
  %247 = vmatpush1.msra.mxu0 %v84
  %248 = vmatprep.subr.mxu0 %v93
  %249 = vmatpush1.msra.mxu0 %v92
  %250 = vmatprep.subr.mxu0 %v101
  %251 = vmatpush1.msra.mxu0 %v100
  %252 = vmatprep.subr.mxu0 %v109
  %253 = vmatpush1.msra.mxu0 %v108
  %254 = vmatprep.subr.mxu0 %v117
  %255 = vmatpush1.msra.mxu0 %v116
  %256 = vmatprep.subr.mxu0 %v145
  %257 = vmatpush1.msra.mxu0 %v142
  %258 = vmatprep.subr.mxu0 0.0
  %259 = vmatpush1.msra.mxu0 0.0
  %260 = vmatprep.subr.mxu0 0.0
  %261 = vmatpush1.msra.mxu0 0.0
  %262 = vmatprep.subr.mxu0 0.0
  %263 = vmatpush1.msra.mxu0 0.0
  %264 = vmatprep.subr.mxu0 0.0
  %265 = vmatpush1.msra.mxu0 0.0
  %266 = vmatprep.subr.mxu0 0.0
  %267 = vmatpush1.msra.mxu0 0.0
  %268 = vmatprep.subr.mxu0 0.0
  %269 = vmatpush1.msra.mxu0 0.0
  %270 = vmatprep.subr.mxu0 0.0
  %271 = vmatpush1.msra.mxu0 0.0
  %272 = vmatprep.subr.mxu0 0.0
  %273 = vmatpush1.msra.mxu0 0.0
  %274 = vmatprep.subr.mxu0 0.0
  %275 = vmatpush1.msra.mxu0 0.0
  %276 = vmatprep.subr.mxu0 0.0
  %277 = vmatpush1.msra.mxu0 0.0
  %278 = vmatprep.subr.mxu0 0.0
  %279 = vmatpush1.msra.mxu0 0.0
  %280 = vmatprep.subr.mxu0 0.0
  %281 = vmatpush1.msra.mxu0 0.0
  %282 = vmatprep.subr.mxu0 0.0
  %283 = vmatpush1.msra.mxu0 0.0
  %284 = vmatprep.subr.mxu0 0.0
  %285 = vmatpush1.msra.mxu0 0.0
  %286 = vmatprep.subr.mxu0 0.0
  %287 = vmatpush1.msra.mxu0 0.0
  %288 = vmatprep.subr.mxu0 0.0
  %289 = vmatpush1.msra.mxu0 0.0
  %290 = vmatprep.subr.mxu0 0.0
  %291 = vmatpush1.msra.mxu0 0.0
  %292 = vmatprep.subr.mxu0 0.0
  %293 = vmatpush1.msra.mxu0 0.0
  %294 = vmatprep.mubr.f32.mxu0 0.0
  %295 = vmatmul.mubr.f32.gmra.mrb[0].mxu0 %v132
  %v296 = vpop.f32.mrb[0].mxu0
  %v297 = vadd.f32 0.0, %v296
  %v298 = vpop.f32.mrb[0].mxu0
  %v299 = vadd.f32 0.0, %v298
  %300 = vdwg.mxu0
  %301 = vmatprep.subr.mxu0 %v23
  %302 = vmatpush1.msra.mxu0 %v22
  %303 = vmatprep.subr.mxu0 %v31
  %304 = vmatpush1.msra.mxu0 %v30
  %305 = vmatprep.subr.mxu0 %v39
  %306 = vmatpush1.msra.mxu0 %v38
  %307 = vmatprep.subr.mxu0 %v47
  %308 = vmatpush1.msra.mxu0 %v46
  %309 = vmatprep.subr.mxu0 %v55
  %310 = vmatpush1.msra.mxu0 %v54
  %311 = vmatprep.subr.mxu0 %v63
  %312 = vmatpush1.msra.mxu0 %v62
  %313 = vmatprep.subr.mxu0 %v71
  %314 = vmatpush1.msra.mxu0 %v70
  %315 = vmatprep.subr.mxu0 %v79
  %316 = vmatpush1.msra.mxu0 %v78
  %317 = vmatprep.subr.mxu0 %v87
  %318 = vmatpush1.msra.mxu0 %v86
  %319 = vmatprep.subr.mxu0 %v95
  %320 = vmatpush1.msra.mxu0 %v94
  %321 = vmatprep.subr.mxu0 %v103
  %322 = vmatpush1.msra.mxu0 %v102
  %323 = vmatprep.subr.mxu0 %v111
  %324 = vmatpush1.msra.mxu0 %v110
  %325 = vmatprep.subr.mxu0 %v119
  %326 = vmatpush1.msra.mxu0 %v118
  %327 = vmatprep.subr.mxu0 %v151
  %328 = vmatpush1.msra.mxu0 %v148
  %329 = vmatprep.subr.mxu0 0.0
  %330 = vmatpush1.msra.mxu0 0.0
  %331 = vmatprep.subr.mxu0 0.0
  %332 = vmatpush1.msra.mxu0 0.0
  %333 = vmatprep.subr.mxu0 0.0
  %334 = vmatpush1.msra.mxu0 0.0
  %335 = vmatprep.subr.mxu0 0.0
  %336 = vmatpush1.msra.mxu0 0.0
  %337 = vmatprep.subr.mxu0 0.0
  %338 = vmatpush1.msra.mxu0 0.0
  %339 = vmatprep.subr.mxu0 0.0
  %340 = vmatpush1.msra.mxu0 0.0
  %341 = vmatprep.subr.mxu0 0.0
  %342 = vmatpush1.msra.mxu0 0.0
  %343 = vmatprep.subr.mxu0 0.0
  %344 = vmatpush1.msra.mxu0 0.0
  %345 = vmatprep.subr.mxu0 0.0
  %346 = vmatpush1.msra.mxu0 0.0
  %347 = vmatprep.subr.mxu0 0.0
  %348 = vmatpush1.msra.mxu0 0.0
  %349 = vmatprep.subr.mxu0 0.0
  %350 = vmatpush1.msra.mxu0 0.0
  %351 = vmatprep.subr.mxu0 0.0
  %352 = vmatpush1.msra.mxu0 0.0
  %353 = vmatprep.subr.mxu0 0.0
  %354 = vmatpush1.msra.mxu0 0.0
  %355 = vmatprep.subr.mxu0 0.0
  %356 = vmatpush1.msra.mxu0 0.0
  %357 = vmatprep.subr.mxu0 0.0
  %358 = vmatpush1.msra.mxu0 0.0
  %359 = vmatprep.subr.mxu0 0.0
  %360 = vmatpush1.msra.mxu0 0.0
  %361 = vmatprep.subr.mxu0 0.0
  %362 = vmatpush1.msra.mxu0 0.0
  %363 = vmatprep.subr.mxu0 0.0
  %364 = vmatpush1.msra.mxu0 0.0
  %365 = vmatprep.mubr.f32.mxu0 0.0
  %366 = vmatmul.mubr.f32.gmra.mrb[0].mxu0 %v132
  %v367 = vpop.f32.mrb[0].mxu0
  %v368 = vadd.f32 0.0, %v367
  %v369 = vpop.f32.mrb[0].mxu0
  %v370 = vadd.f32 0.0, %v369
  %371 = vdwg.mxu0
  %372 = vmatprep.subr.mxu0 %v25
  %373 = vmatpush1.msra.mxu0 %v24
  %374 = vmatprep.subr.mxu0 %v33
  %375 = vmatpush1.msra.mxu0 %v32
  %376 = vmatprep.subr.mxu0 %v41
  %377 = vmatpush1.msra.mxu0 %v40
  %378 = vmatprep.subr.mxu0 %v49
  %379 = vmatpush1.msra.mxu0 %v48
  %380 = vmatprep.subr.mxu0 %v57
  %381 = vmatpush1.msra.mxu0 %v56
  %382 = vmatprep.subr.mxu0 %v65
  %383 = vmatpush1.msra.mxu0 %v64
  %384 = vmatprep.subr.mxu0 %v73
  %385 = vmatpush1.msra.mxu0 %v72
  %386 = vmatprep.subr.mxu0 %v81
  %387 = vmatpush1.msra.mxu0 %v80
  %388 = vmatprep.subr.mxu0 %v89
  %389 = vmatpush1.msra.mxu0 %v88
  %390 = vmatprep.subr.mxu0 %v97
  %391 = vmatpush1.msra.mxu0 %v96
  %392 = vmatprep.subr.mxu0 %v105
  %393 = vmatpush1.msra.mxu0 %v104
  %394 = vmatprep.subr.mxu0 %v113
  %395 = vmatpush1.msra.mxu0 %v112
  %396 = vmatprep.subr.mxu0 %v121
  %397 = vmatpush1.msra.mxu0 %v120
  %398 = vmatprep.subr.mxu0 %v157
  %399 = vmatpush1.msra.mxu0 %v154
  %400 = vmatprep.subr.mxu0 0.0
  %401 = vmatpush1.msra.mxu0 0.0
  %402 = vmatprep.subr.mxu0 0.0
  %403 = vmatpush1.msra.mxu0 0.0
  %404 = vmatprep.subr.mxu0 0.0
  %405 = vmatpush1.msra.mxu0 0.0
  %406 = vmatprep.subr.mxu0 0.0
  %407 = vmatpush1.msra.mxu0 0.0
  %408 = vmatprep.subr.mxu0 0.0
  %409 = vmatpush1.msra.mxu0 0.0
  %410 = vmatprep.subr.mxu0 0.0
  %411 = vmatpush1.msra.mxu0 0.0
  %412 = vmatprep.subr.mxu0 0.0
  %413 = vmatpush1.msra.mxu0 0.0
  %414 = vmatprep.subr.mxu0 0.0
  %415 = vmatpush1.msra.mxu0 0.0
  %416 = vmatprep.subr.mxu0 0.0
  %417 = vmatpush1.msra.mxu0 0.0
  %418 = vmatprep.subr.mxu0 0.0
  %419 = vmatpush1.msra.mxu0 0.0
  %420 = vmatprep.subr.mxu0 0.0
  %421 = vmatpush1.msra.mxu0 0.0
  %422 = vmatprep.subr.mxu0 0.0
  %423 = vmatpush1.msra.mxu0 0.0
  %424 = vmatprep.subr.mxu0 0.0
  %425 = vmatpush1.msra.mxu0 0.0
  %426 = vmatprep.subr.mxu0 0.0
  %427 = vmatpush1.msra.mxu0 0.0
  %428 = vmatprep.subr.mxu0 0.0
  %429 = vmatpush1.msra.mxu0 0.0
  %430 = vmatprep.subr.mxu0 0.0
  %431 = vmatpush1.msra.mxu0 0.0
  %432 = vmatprep.subr.mxu0 0.0
  %433 = vmatpush1.msra.mxu0 0.0
  %434 = vmatprep.subr.mxu0 0.0
  %435 = vmatpush1.msra.mxu0 0.0
  %436 = vmatprep.mubr.f32.mxu0 0.0
  %437 = vmatmul.mubr.f32.gmra.mrb[0].mxu0 %v132
  %v438 = vpop.f32.mrb[0].mxu0
  %v439 = vadd.f32 0.0, %v438
  %v440 = vpop.f32.mrb[0].mxu0
  %v441 = vadd.f32 0.0, %v440
  %442 = vdwg.mxu0
  %v443 = vadd.f32 %v226, %v228
  %v444 = vadd.f32 %v443, %v297
  %v445 = vadd.f32 %v444, %v299
  %v446 = vadd.f32 %v445, %v368
  %v447 = vadd.f32 %v446, %v370
  %v448 = vadd.f32 %v447, %v439
  %v449 = vadd.f32 %v448, %v441
  %450 = vadd.xlane.f32.xlu0 %v449
  %v451 = vpop.xlane.xlu0 %450
  %v452 = vmul.f32 %v226, %v226
  %v453 = vmul.f32 %v228, %v228
  %v454 = vmul.f32 %v297, %v297
  %v455 = vmul.f32 %v299, %v299
  %v456 = vmul.f32 %v368, %v368
  %v457 = vmul.f32 %v370, %v370
  %v458 = vmul.f32 %v439, %v439
  %v459 = vmul.f32 %v441, %v441
  %v460 = vadd.f32 %v452, %v453
  %v461 = vadd.f32 %v460, %v454
  %v462 = vadd.f32 %v461, %v455
  %v463 = vadd.f32 %v462, %v456
  %v464 = vadd.f32 %v463, %v457
  %v465 = vadd.f32 %v464, %v458
  %v466 = vadd.f32 %v465, %v459
  %467 = vadd.xlane.f32.xlu0 %v466
  %v468 = vpop.xlane.xlu0 %467
  %v469 = vmul.f32 %v451, 0.0009765625
  %v470 = vmul.f32 %v468, 0.0009765625
  %v471 = vmul.f32 %v469, %v469
  %v472 = vsub.f32 %v470, %v471
  %v473 = vld [vmem:[%s2] sm:$0xff]
  %v474 = vadd.f32 %v472, 1e-05
  %v475 = vrsqrt.pop %v474
  %v476 = vmul.f32 %v473, %v475
  %v477 = vld [vmem:[%s3] sm:$0xff]
  %v478 = vmul.f32 %v469, %v476
  %v479 = vsub.f32 %v477, %v478
  %481 = vset.pattern.permute.xlu0 0
  %482 = vperm.xlu0 %481, %v476
  %v483 = vpop.permute.xlu0 %482
  %v485 = vmul.f32 %v226, %v483
  %v486 = vmul.f32 %v228, %v483
  %v487 = vmul.f32 %v297, %v483
  %v488 = vmul.f32 %v299, %v483
  %v489 = vmul.f32 %v368, %v483
  %v490 = vmul.f32 %v370, %v483
  %v491 = vmul.f32 %v439, %v483
  %v492 = vmul.f32 %v441, %v483
  %494 = vset.pattern.permute.xlu0 0
  %495 = vperm.xlu0 %494, %v479
  %v496 = vpop.permute.xlu0 %495
  %v498 = vadd.f32 %v485, %v496
  %v499 = vadd.f32 %v486, %v496
  %v500 = vadd.f32 %v487, %v496
  %v501 = vadd.f32 %v488, %v496
  %v502 = vadd.f32 %v489, %v496
  %v503 = vadd.f32 %v490, %v496
  %v504 = vadd.f32 %v491, %v496
  %v505 = vadd.f32 %v492, %v496
  %v506 = vmax.f32 %v498, 0.0
  %v507 = vmax.f32 %v499, 0.0
  %v508 = vmax.f32 %v500, 0.0
  %v509 = vmax.f32 %v501, 0.0
  %v510 = vmax.f32 %v502, 0.0
  %v511 = vmax.f32 %v503, 0.0
  %v512 = vmax.f32 %v504, 0.0
  %v513 = vmax.f32 %v505, 0.0
  %514 = vst [vmem:[%s4] sm:$0xff] %v506
  %515 = vst [vmem:[%s4 + $0x8] sm:$0xff] %v507
  %516 = vst [vmem:[%s4 + $0x10] sm:$0xff] %v508
  %517 = vst [vmem:[%s4 + $0x18] sm:$0xff] %v509
  %518 = vst [vmem:[%s4 + $0x20] sm:$0xff] %v510
  %519 = vst [vmem:[%s4 + $0x28] sm:$0xff] %v511
  %520 = vst [vmem:[%s4 + $0x30] sm:$0xff] %v512
  %521 = vst [vmem:[%s4 + $0x38] sm:$0xff] %v513
  // Predicated region
  $region18: #{batchnorm_relu_3d.1} parent=0 // pred_check
    _
  $region19: #{batchnorm_relu_3d.1} parent=0 // pred_check_branch
    %523 = sbr.rel (0) target = $region21
  $region20: #{batchnorm_relu_3d.1} parent=0 // pred_region
    _
  $region21: #{batchnorm_relu_3d.1} parent=0 // pred_fallthru
    _
  // Predicated region
  $region22: #{batchnorm_relu_3d.1} parent=0 // pred_check
    _
  $region23: #{batchnorm_relu_3d.1} parent=0 // pred_check_branch
    %525 = sbr.rel (0) target = $region25
  $region24: #{batchnorm_relu_3d.1} parent=0 // pred_region
    _
  $region25: #{batchnorm_relu_3d.1} parent=0 // pred_fallthru
    _

</llo_original>
